<compile_context>
chip_gen: v5e
topology: v5e:2x2
jax: 0.10.0
libtpu: 0.0.40
codegen_flags: <defaults>
</compile_context>

<pallas_src>
import functools

import jax
import jax.numpy as jnp
from jax.experimental import pallas as pl
from jax.experimental.pallas import tpu as pltpu


def _attention_kernel(x_ref, wqkv_ref, wproj_ref, bproj_ref, o_ref, acc_ref,
                      *, num_heads):
    x = x_ref[0]                                       # (N, C), input dtype
    N, C = x.shape
    hd = C // num_heads

    # Single MXU matmul producing q|k|v.  The q columns of wqkv were pre-scaled
    # by head_dim**-0.5 in the wrapper, so no per-score scaling is needed.
    qkv = jnp.dot(x.astype(jnp.bfloat16), wqkv_ref[...],
                  preferred_element_type=jnp.float32)  # (N, 3C) f32

    # Per-head attention, static unroll.  Each head's output is stored
    # directly into its column slice of the VMEM scratch accumulator.
    for h in range(num_heads):
        q = qkv[:, h * hd:(h + 1) * hd]                        # (N, hd), pre-scaled
        k = qkv[:, C + h * hd:C + (h + 1) * hd]                # (N, hd)
        v = qkv[:, 2 * C + h * hd:2 * C + (h + 1) * hd]        # (N, hd)

        s = jnp.dot(q.astype(jnp.bfloat16), k.astype(jnp.bfloat16).T,
                    preferred_element_type=jnp.float32)        # (N, N) f32
        s = s - jnp.max(s, axis=-1, keepdims=True)
        p = jnp.exp(s)
        inv = pl.reciprocal(jnp.sum(p, axis=-1, keepdims=True), approx=True)
        p = p * inv                                            # softmax, f32

        acc_ref[:, h * hd:(h + 1) * hd] = jnp.dot(
            p.astype(jnp.bfloat16), v.astype(jnp.bfloat16),
            preferred_element_type=jnp.float32)                # (N, hd)

    # Output projection (bias kept in f32, added after the f32-accumulated matmul).
    out = jnp.dot(acc_ref[...].astype(jnp.bfloat16), wproj_ref[...],
                  preferred_element_type=jnp.float32) + bproj_ref[...]
    o_ref[0] = out.astype(o_ref.dtype)


def attention_forward(x, params, num_heads):
    B, N, C = x.shape
    hd = C // num_heads
    scale = hd ** (-0.5)

    # Fold the softmax scale into the q columns of wqkv (zero in-kernel cost),
    # then cast the big weights to bf16 for native-MXU matmuls / half VMEM.
    wqkv = params["wqkv"].at[:, :C].multiply(scale).astype(jnp.bfloat16)
    wproj = params["wproj"].astype(jnp.bfloat16)
    bproj = params["bproj"].reshape(1, C).astype(jnp.float32)

    def full2d(arr):
        # Whole (un-tiled) weight, resident in VMEM for every grid step.
        return pl.BlockSpec(arr.shape, lambda b: (0, 0))

    kernel = functools.partial(_attention_kernel, num_heads=num_heads)

    return pl.pallas_call(
        kernel,
        out_shape=jax.ShapeDtypeStruct((B, N, C), x.dtype),
        grid=(B,),
        in_specs=[pl.BlockSpec((1, N, C), lambda b: (b, 0, 0)),
                  full2d(wqkv), full2d(wproj), full2d(bproj)],
        out_specs=pl.BlockSpec((1, N, C), lambda b: (b, 0, 0)),
        scratch_shapes=[pltpu.VMEM((N, C), jnp.float32)],
        compiler_params=pltpu.CompilerParams(
            dimension_semantics=("parallel",),
            vmem_limit_bytes=56 * 1024 * 1024),
    )(x, wqkv, wproj, bproj)


# ---------------- pure-JAX reference (mirrors the PyTorch forward, f32) ----------------
def attention_reference(x, p, num_heads):
    B, N, C = x.shape
    hd = C // num_heads
    scale = hd ** (-0.5)

    qkv = x @ p["wqkv"]                                          # (B, N, 3C)
    qkv = qkv.reshape(B, N, 3, num_heads, hd).transpose(2, 0, 3, 1, 4)
    q, k, v = qkv[0], qkv[1], qkv[2]                             # (B, h, N, hd)
    attn = jnp.einsum("bhnd,bhmd->bhnm", q, k) * scale
    attn = jax.nn.softmax(attn, axis=-1)
    o = jnp.einsum("bhnm,bhmd->bhnd", attn, v)
    o = o.transpose(0, 2, 1, 3).reshape(B, N, C)
    return o @ p["wproj"] + p["bproj"]
    # attn_drop / proj_drop are p=0.0 -> identity (no-op in forward).


def make_params(key, dim):
    ks = jax.random.split(key, 3)
    s = 0.02
    return {
        # qkv: Linear(dim, 3*dim, bias=False); stored transposed (dim, 3*dim)
        "wqkv": s * jax.random.normal(ks[0], (dim, 3 * dim), jnp.float32),
        # proj: Linear(dim, dim) with bias; stored transposed
        "wproj": s * jax.random.normal(ks[1], (dim, dim), jnp.float32),
        "bproj": s * jax.random.normal(ks[2], (dim,), jnp.float32),
    }


if __name__ == "__main__":
    B, N, C = 2, 8, 32          # batch, tokens, embed dim
    num_heads = 4               # head_dim = 8
    key = jax.random.PRNGKey(0)
    kx, kp = jax.random.split(key)
    x = jax.random.normal(kx, (B, N, C), jnp.float32)
    params = make_params(kp, C)

    out = attention_forward(x, params, num_heads)
    out = jax.block_until_ready(out)

    ref = attention_reference(x, params, num_heads)
    assert out.shape == (B, N, C)
    # bf16 matmuls + approx reciprocal vs. the f32 reference -> loosened tolerance.
    assert jnp.allclose(out, ref, rtol=5e-2, atol=5e-3), (
        f"max abs diff {jnp.max(jnp.abs(out - ref))}")

    print("KERNEL_OK")
</pallas_src>

<mosaic_0001>
module attributes {stable_mosaic.version = 11 : i64} {
  func.func @_attention_kernel(%arg0: i32, %arg1: memref<1x8x32xf32, #tpu.memory_space<vmem>>, %arg2: memref<32x96xbf16, #tpu.memory_space<vmem>>, %arg3: memref<32x32xbf16, #tpu.memory_space<vmem>>, %arg4: memref<1x32xf32, #tpu.memory_space<vmem>>, %arg5: memref<1x8x32xf32, #tpu.memory_space<vmem>>, %arg6: memref<8x32xf32, #tpu.memory_space<vmem>>) attributes {dimension_semantics = [#tpu.dimension_semantics<parallel>], iteration_bounds = array<i64: 2>, scalar_prefetch = 0 : i64, scratch_operands = 1 : i64, tpu.core_type = #tpu.core_type<tc>, window_params = [{transform_indices = @transform_0, window_bounds = array<i64: 1, 8, 32>}, {pipeline_mode = #tpu.pipeline_mode<synchronous>, transform_indices = @transform_1, window_bounds = array<i64: 32, 96>}, {pipeline_mode = #tpu.pipeline_mode<synchronous>, transform_indices = @transform_2, window_bounds = array<i64: 32, 32>}, {pipeline_mode = #tpu.pipeline_mode<synchronous>, transform_indices = @transform_3, window_bounds = array<i64: 1, 32>}, {transform_indices = @transform_4, window_bounds = array<i64: 1, 8, 32>}]} {
    %c0 = arith.constant 0 : index
    %c0_0 = arith.constant 0 : index
    %c0_1 = arith.constant 0 : index
    %0 = vector.load %arg1[%c0, %c0_0, %c0_1] : memref<1x8x32xf32, #tpu.memory_space<vmem>>, vector<1x8x32xf32>
    %1 = vector.shape_cast %0 : vector<1x8x32xf32> to vector<8x32xf32>
    %2 = arith.truncf %1 : vector<8x32xf32> to vector<8x32xbf16>
    %c0_2 = arith.constant 0 : index
    %c0_3 = arith.constant 0 : index
    %3 = vector.load %arg2[%c0_2, %c0_3] : memref<32x96xbf16, #tpu.memory_space<vmem>>, vector<32x96xbf16>
    %cst = arith.constant dense<0.000000e+00> : vector<8x96xf32>
    %4 = tpu.matmul %2, %3, %cst {dimension_numbers = #tpu.dot_dimension_numbers<[1], [0], [0], [1], [0, 0, 1, 1], [], []>} : vector<8x32xbf16>, vector<32x96xbf16>, vector<8x96xf32> -> vector<8x96xf32>
    %5 = vector.extract_strided_slice %4 {offsets = [0, 0], sizes = [8, 8], strides = [1, 1]} : vector<8x96xf32> to vector<8x8xf32>
    %6 = vector.extract_strided_slice %4 {offsets = [0, 32], sizes = [8, 8], strides = [1, 1]} : vector<8x96xf32> to vector<8x8xf32>
    %7 = vector.extract_strided_slice %4 {offsets = [0, 64], sizes = [8, 8], strides = [1, 1]} : vector<8x96xf32> to vector<8x8xf32>
    %8 = arith.truncf %5 : vector<8x8xf32> to vector<8x8xbf16>
    %9 = arith.truncf %6 : vector<8x8xf32> to vector<8x8xbf16>
    %10 = tpu.transpose %9, [1, 0] : vector<8x8xbf16> -> vector<8x8xbf16>
    %cst_4 = arith.constant dense<0.000000e+00> : vector<8x8xf32>
    %11 = tpu.matmul %8, %10, %cst_4 {dimension_numbers = #tpu.dot_dimension_numbers<[1], [0], [0], [1], [0, 0, 1, 1], [], []>} : vector<8x8xbf16>, vector<8x8xbf16>, vector<8x8xf32> -> vector<8x8xf32>
    %cst_5 = arith.constant dense<0xFF800000> : vector<8xf32>
    %12 = vector.multi_reduction <maximumf>, %11, %cst_5 [1] : vector<8x8xf32> to vector<8xf32>
    %13 = vector.shape_cast %12 : vector<8xf32> to vector<8x1xf32>
    %14 = vector.broadcast %13 : vector<8x1xf32> to vector<8x8xf32>
    %15 = arith.subf %11, %14 : vector<8x8xf32>
    %16 = math.exp %15 : vector<8x8xf32>
    %cst_6 = arith.constant dense<0.000000e+00> : vector<8xf32>
    %17 = vector.multi_reduction <add>, %16, %cst_6 [1] : vector<8x8xf32> to vector<8xf32>
    %18 = vector.shape_cast %17 : vector<8xf32> to vector<8x1xf32>
    %19 = tpu.reciprocal %18 {approx = true} : vector<8x1xf32> -> vector<8x1xf32>
    %20 = vector.broadcast %19 : vector<8x1xf32> to vector<8x8xf32>
    %21 = arith.mulf %16, %20 : vector<8x8xf32>
    %22 = arith.truncf %21 : vector<8x8xf32> to vector<8x8xbf16>
    %23 = arith.truncf %7 : vector<8x8xf32> to vector<8x8xbf16>
    %cst_7 = arith.constant dense<0.000000e+00> : vector<8x8xf32>
    %24 = tpu.matmul %22, %23, %cst_7 {dimension_numbers = #tpu.dot_dimension_numbers<[1], [0], [0], [1], [0, 0, 1, 1], [], []>} : vector<8x8xbf16>, vector<8x8xbf16>, vector<8x8xf32> -> vector<8x8xf32>
    %c0_8 = arith.constant 0 : index
    %c0_9 = arith.constant 0 : index
    %25 = vector.load %arg6[%c0_8, %c0_9] : memref<8x32xf32, #tpu.memory_space<vmem>>, vector<8x8xf32>
    tpu.vector_store %arg6[%c0_8, %c0_9], %24 {strides = array<i32>} : memref<8x32xf32, #tpu.memory_space<vmem>>, vector<8x8xf32>,
    %26 = vector.extract_strided_slice %4 {offsets = [0, 8], sizes = [8, 8], strides = [1, 1]} : vector<8x96xf32> to vector<8x8xf32>
    %27 = vector.extract_strided_slice %4 {offsets = [0, 40], sizes = [8, 8], strides = [1, 1]} : vector<8x96xf32> to vector<8x8xf32>
    %28 = vector.extract_strided_slice %4 {offsets = [0, 72], sizes = [8, 8], strides = [1, 1]} : vector<8x96xf32> to vector<8x8xf32>
    %29 = arith.truncf %26 : vector<8x8xf32> to vector<8x8xbf16>
    %30 = arith.truncf %27 : vector<8x8xf32> to vector<8x8xbf16>
    %31 = tpu.transpose %30, [1, 0] : vector<8x8xbf16> -> vector<8x8xbf16>
    %cst_10 = arith.constant dense<0.000000e+00> : vector<8x8xf32>
    %32 = tpu.matmul %29, %31, %cst_10 {dimension_numbers = #tpu.dot_dimension_numbers<[1], [0], [0], [1], [0, 0, 1, 1], [], []>} : vector<8x8xbf16>, vector<8x8xbf16>, vector<8x8xf32> -> vector<8x8xf32>
    %cst_11 = arith.constant dense<0xFF800000> : vector<8xf32>
    %33 = vector.multi_reduction <maximumf>, %32, %cst_11 [1] : vector<8x8xf32> to vector<8xf32>
    %34 = vector.shape_cast %33 : vector<8xf32> to vector<8x1xf32>
    %35 = vector.broadcast %34 : vector<8x1xf32> to vector<8x8xf32>
    %36 = arith.subf %32, %35 : vector<8x8xf32>
    %37 = math.exp %36 : vector<8x8xf32>
    %cst_12 = arith.constant dense<0.000000e+00> : vector<8xf32>
    %38 = vector.multi_reduction <add>, %37, %cst_12 [1] : vector<8x8xf32> to vector<8xf32>
    %39 = vector.shape_cast %38 : vector<8xf32> to vector<8x1xf32>
    %40 = tpu.reciprocal %39 {approx = true} : vector<8x1xf32> -> vector<8x1xf32>
    %41 = vector.broadcast %40 : vector<8x1xf32> to vector<8x8xf32>
    %42 = arith.mulf %37, %41 : vector<8x8xf32>
    %43 = arith.truncf %42 : vector<8x8xf32> to vector<8x8xbf16>
    %44 = arith.truncf %28 : vector<8x8xf32> to vector<8x8xbf16>
    %cst_13 = arith.constant dense<0.000000e+00> : vector<8x8xf32>
    %45 = tpu.matmul %43, %44, %cst_13 {dimension_numbers = #tpu.dot_dimension_numbers<[1], [0], [0], [1], [0, 0, 1, 1], [], []>} : vector<8x8xbf16>, vector<8x8xbf16>, vector<8x8xf32> -> vector<8x8xf32>
    %c0_14 = arith.constant 0 : index
    %c8 = arith.constant 8 : index
    %46 = vector.load %arg6[%c0_14, %c8] : memref<8x32xf32, #tpu.memory_space<vmem>>, vector<8x8xf32>
    tpu.vector_store %arg6[%c0_14, %c8], %45 {strides = array<i32>} : memref<8x32xf32, #tpu.memory_space<vmem>>, vector<8x8xf32>,
    %47 = vector.extract_strided_slice %4 {offsets = [0, 16], sizes = [8, 8], strides = [1, 1]} : vector<8x96xf32> to vector<8x8xf32>
    %48 = vector.extract_strided_slice %4 {offsets = [0, 48], sizes = [8, 8], strides = [1, 1]} : vector<8x96xf32> to vector<8x8xf32>
    %49 = vector.extract_strided_slice %4 {offsets = [0, 80], sizes = [8, 8], strides = [1, 1]} : vector<8x96xf32> to vector<8x8xf32>
    %50 = arith.truncf %47 : vector<8x8xf32> to vector<8x8xbf16>
    %51 = arith.truncf %48 : vector<8x8xf32> to vector<8x8xbf16>
    %52 = tpu.transpose %51, [1, 0] : vector<8x8xbf16> -> vector<8x8xbf16>
    %cst_15 = arith.constant dense<0.000000e+00> : vector<8x8xf32>
    %53 = tpu.matmul %50, %52, %cst_15 {dimension_numbers = #tpu.dot_dimension_numbers<[1], [0], [0], [1], [0, 0, 1, 1], [], []>} : vector<8x8xbf16>, vector<8x8xbf16>, vector<8x8xf32> -> vector<8x8xf32>
    %cst_16 = arith.constant dense<0xFF800000> : vector<8xf32>
    %54 = vector.multi_reduction <maximumf>, %53, %cst_16 [1] : vector<8x8xf32> to vector<8xf32>
    %55 = vector.shape_cast %54 : vector<8xf32> to vector<8x1xf32>
    %56 = vector.broadcast %55 : vector<8x1xf32> to vector<8x8xf32>
    %57 = arith.subf %53, %56 : vector<8x8xf32>
    %58 = math.exp %57 : vector<8x8xf32>
    %cst_17 = arith.constant dense<0.000000e+00> : vector<8xf32>
    %59 = vector.multi_reduction <add>, %58, %cst_17 [1] : vector<8x8xf32> to vector<8xf32>
    %60 = vector.shape_cast %59 : vector<8xf32> to vector<8x1xf32>
    %61 = tpu.reciprocal %60 {approx = true} : vector<8x1xf32> -> vector<8x1xf32>
    %62 = vector.broadcast %61 : vector<8x1xf32> to vector<8x8xf32>
    %63 = arith.mulf %58, %62 : vector<8x8xf32>
    %64 = arith.truncf %63 : vector<8x8xf32> to vector<8x8xbf16>
    %65 = arith.truncf %49 : vector<8x8xf32> to vector<8x8xbf16>
    %cst_18 = arith.constant dense<0.000000e+00> : vector<8x8xf32>
    %66 = tpu.matmul %64, %65, %cst_18 {dimension_numbers = #tpu.dot_dimension_numbers<[1], [0], [0], [1], [0, 0, 1, 1], [], []>} : vector<8x8xbf16>, vector<8x8xbf16>, vector<8x8xf32> -> vector<8x8xf32>
    %c0_19 = arith.constant 0 : index
    %c16 = arith.constant 16 : index
    %67 = vector.load %arg6[%c0_19, %c16] : memref<8x32xf32, #tpu.memory_space<vmem>>, vector<8x8xf32>
    tpu.vector_store %arg6[%c0_19, %c16], %66 {strides = array<i32>} : memref<8x32xf32, #tpu.memory_space<vmem>>, vector<8x8xf32>,
    %68 = vector.extract_strided_slice %4 {offsets = [0, 24], sizes = [8, 8], strides = [1, 1]} : vector<8x96xf32> to vector<8x8xf32>
    %69 = vector.extract_strided_slice %4 {offsets = [0, 56], sizes = [8, 8], strides = [1, 1]} : vector<8x96xf32> to vector<8x8xf32>
    %70 = vector.extract_strided_slice %4 {offsets = [0, 88], sizes = [8, 8], strides = [1, 1]} : vector<8x96xf32> to vector<8x8xf32>
    %71 = arith.truncf %68 : vector<8x8xf32> to vector<8x8xbf16>
    %72 = arith.truncf %69 : vector<8x8xf32> to vector<8x8xbf16>
    %73 = tpu.transpose %72, [1, 0] : vector<8x8xbf16> -> vector<8x8xbf16>
    %cst_20 = arith.constant dense<0.000000e+00> : vector<8x8xf32>
    %74 = tpu.matmul %71, %73, %cst_20 {dimension_numbers = #tpu.dot_dimension_numbers<[1], [0], [0], [1], [0, 0, 1, 1], [], []>} : vector<8x8xbf16>, vector<8x8xbf16>, vector<8x8xf32> -> vector<8x8xf32>
    %cst_21 = arith.constant dense<0xFF800000> : vector<8xf32>
    %75 = vector.multi_reduction <maximumf>, %74, %cst_21 [1] : vector<8x8xf32> to vector<8xf32>
    %76 = vector.shape_cast %75 : vector<8xf32> to vector<8x1xf32>
    %77 = vector.broadcast %76 : vector<8x1xf32> to vector<8x8xf32>
    %78 = arith.subf %74, %77 : vector<8x8xf32>
    %79 = math.exp %78 : vector<8x8xf32>
    %cst_22 = arith.constant dense<0.000000e+00> : vector<8xf32>
    %80 = vector.multi_reduction <add>, %79, %cst_22 [1] : vector<8x8xf32> to vector<8xf32>
    %81 = vector.shape_cast %80 : vector<8xf32> to vector<8x1xf32>
    %82 = tpu.reciprocal %81 {approx = true} : vector<8x1xf32> -> vector<8x1xf32>
    %83 = vector.broadcast %82 : vector<8x1xf32> to vector<8x8xf32>
    %84 = arith.mulf %79, %83 : vector<8x8xf32>
    %85 = arith.truncf %84 : vector<8x8xf32> to vector<8x8xbf16>
    %86 = arith.truncf %70 : vector<8x8xf32> to vector<8x8xbf16>
    %cst_23 = arith.constant dense<0.000000e+00> : vector<8x8xf32>
    %87 = tpu.matmul %85, %86, %cst_23 {dimension_numbers = #tpu.dot_dimension_numbers<[1], [0], [0], [1], [0, 0, 1, 1], [], []>} : vector<8x8xbf16>, vector<8x8xbf16>, vector<8x8xf32> -> vector<8x8xf32>
    %c0_24 = arith.constant 0 : index
    %c24 = arith.constant 24 : index
    %88 = vector.load %arg6[%c0_24, %c24] : memref<8x32xf32, #tpu.memory_space<vmem>>, vector<8x8xf32>
    tpu.vector_store %arg6[%c0_24, %c24], %87 {strides = array<i32>} : memref<8x32xf32, #tpu.memory_space<vmem>>, vector<8x8xf32>,
    %c0_25 = arith.constant 0 : index
    %c0_26 = arith.constant 0 : index
    %89 = vector.load %arg6[%c0_25, %c0_26] : memref<8x32xf32, #tpu.memory_space<vmem>>, vector<8x32xf32>
    %90 = arith.truncf %89 : vector<8x32xf32> to vector<8x32xbf16>
    %c0_27 = arith.constant 0 : index
    %c0_28 = arith.constant 0 : index
    %91 = vector.load %arg3[%c0_27, %c0_28] : memref<32x32xbf16, #tpu.memory_space<vmem>>, vector<32x32xbf16>
    %cst_29 = arith.constant dense<0.000000e+00> : vector<8x32xf32>
    %92 = tpu.matmul %90, %91, %cst_29 {dimension_numbers = #tpu.dot_dimension_numbers<[1], [0], [0], [1], [0, 0, 1, 1], [], []>} : vector<8x32xbf16>, vector<32x32xbf16>, vector<8x32xf32> -> vector<8x32xf32>
    %c0_30 = arith.constant 0 : index
    %c0_31 = arith.constant 0 : index
    %93 = vector.load %arg4[%c0_30, %c0_31] : memref<1x32xf32, #tpu.memory_space<vmem>>, vector<1x32xf32>
    %94 = vector.broadcast %93 : vector<1x32xf32> to vector<8x32xf32>
    %95 = arith.addf %92, %94 : vector<8x32xf32>
    %c0_32 = arith.constant 0 : index
    %c0_33 = arith.constant 0 : index
    %c0_34 = arith.constant 0 : index
    %96 = vector.load %arg5[%c0_32, %c0_33, %c0_34] : memref<1x8x32xf32, #tpu.memory_space<vmem>>, vector<1x8x32xf32>
    %97 = vector.shape_cast %96 : vector<1x8x32xf32> to vector<8x32xf32>
    %98 = vector.shape_cast %95 : vector<8x32xf32> to vector<1x8x32xf32>
    tpu.vector_store %arg5[%c0_32, %c0_33, %c0_34], %98 {strides = array<i32>} : memref<1x8x32xf32, #tpu.memory_space<vmem>>, vector<1x8x32xf32>,
    return
  }
  func.func @transform_0(%arg0: i32) -> (i32, i32, i32) {
    %c0_i32 = arith.constant 0 : i32
    %c0_i32_0 = arith.constant 0 : i32
    %c0_i32_1 = arith.constant 0 : i32
    return %arg0, %c0_i32, %c0_i32_0 : i32, i32, i32
  }
  func.func @transform_1(%arg0: i32) -> (i32, i32) {
    %c0_i32 = arith.constant 0 : i32
    %c0_i32_0 = arith.constant 0 : i32
    %c0_i32_1 = arith.constant 0 : i32
    return %c0_i32, %c0_i32_0 : i32, i32
  }
  func.func @transform_2(%arg0: i32) -> (i32, i32) {
    %c0_i32 = arith.constant 0 : i32
    %c0_i32_0 = arith.constant 0 : i32
    %c0_i32_1 = arith.constant 0 : i32
    return %c0_i32, %c0_i32_0 : i32, i32
  }
  func.func @transform_3(%arg0: i32) -> (i32, i32) {
    %c0_i32 = arith.constant 0 : i32
    %c0_i32_0 = arith.constant 0 : i32
    %c0_i32_1 = arith.constant 0 : i32
    return %c0_i32, %c0_i32_0 : i32, i32
  }
  func.func @transform_4(%arg0: i32) -> (i32, i32, i32) {
    %c0_i32 = arith.constant 0 : i32
    %c0_i32_0 = arith.constant 0 : i32
    %c0_i32_1 = arith.constant 0 : i32
    return %arg0, %c0_i32, %c0_i32_0 : i32, i32, i32
  }
}

</mosaic_0001>

<llo_original>
// kernel: tpu_custom_call.1
$region0: #{tpu_custom_call.1}
  #allocation0 [shape = 'u32[]', space=smem, size = 0x4, offset = 0x4, fixed_abs, tag = 'smem constant byte address 0x4 - core index']
  #allocation1 [shape = 'u32[72,128]{1,0:T(1,128)}', space=vmem, size = 0x9000, scoped, tag = 'internal scratch']
  #allocation2 [shape = 'f32[8,32]{1,0:T(8,128)}', space=vmem, size = 0x1000, scoped, tag = 'scratch operand']
  %s0 = inlined_call_operand.hbm [shape: f32[2,8,32], index: 0, kind: input, shape index: {}]
  %s1 = inlined_call_operand.hbm [shape: bf16[32,96], index: 1, kind: input, shape index: {}]
  %s2 = inlined_call_operand.hbm [shape: bf16[32,32], index: 2, kind: input, shape index: {}]
  %s3 = inlined_call_operand.vmem [shape: f32[1,32], index: 3, kind: input, shape index: {}]
  %s4 = inlined_call_operand.hbm [shape: f32[2,8,32], index: 4, kind: output, shape index: {}]
  %s5 = sld [smem:[#allocation0]]
  $region61: #{tpu_custom_call.1} parent=0
    _
  %s7 = ssub.s32 1, %s5
  %s8 = scalar_select 0, %s7, %s5
  $region1: #{tpu_custom_call.1} parent=0
    #allocation3 [shape = 'u8[8192]{0}', space=vmem, size = 0x2000, scoped, tag = 'input window, operand 0']
    #allocation4 [shape = 's32[2]{0}', space=sflag, size = 0x8, scoped, tag = 'scoped memory for tpu_custom_call.1']
    #allocation5 [shape = 's32[2]{0}', space=sflag, size = 0x8, scoped, tag = 'scoped memory for tpu_custom_call.1']
    #allocation6 [shape = 'u8[8192]{0}', space=vmem, size = 0x2000, scoped, tag = 'input window, operand 1, single buffered']
    #allocation7 [shape = 's32[1]{0}', space=sflag, size = 0x4, scoped, tag = 'scoped memory for tpu_custom_call.1']
    #allocation8 [shape = 'u8[8192]{0}', space=vmem, size = 0x2000, scoped, tag = 'input window, operand 2, single buffered']
    #allocation9 [shape = 'u8[8192]{0}', space=vmem, size = 0x2000, scoped, tag = 'output window, operand 0']
    %9 = vsyncpa [#allocation4], 0
    %s10 = scalar_lea.sflag [#allocation4], 1
    %11 = vsyncpa %s10, 0
    %12 = vsyncpa [#allocation7], 0
    %13 = vsyncpa [#allocation5], 0
    %s14 = scalar_lea.sflag [#allocation5], 1
    %15 = vsyncpa %s14, 0
    loop: start=0, step=1, limit=4
    $region2: #{tpu_custom_call.1} parent=1 // loop_pre_header
      _
    $region3: #{tpu_custom_call.1} parent=1 // loop_header
      %s17 = sphi 0, %s21
      %p18 = scmp.ge.s32.totalorder %s17, 4
      %s27 = sphi 0, %s29
      %s30 = sphi 0, %s27
      %s31 = sphi 0, %s30
      %s47 = sphi 0, %s31
      %s51 = sphi 0, %s51
      %s53 = sphi 0, %s51
      %s54 = sphi 0, %s53
      %s68 = sphi 0, %s54
      %s72 = sphi 0, %s72
      %s74 = sphi 0, %s72
      %s75 = sphi 0, %s74
      %s89 = sphi 0, %s75
      %s93 = sphi 0, %s93
      %s95 = sphi 0, %s93
      %s96 = sphi 0, %s95
      %s110 = sphi 0, %s96
      %s116 = sphi 0, %s118
      %s119 = sphi 0, %s116
      %s120 = sphi 0, %s119
      %s136 = sphi 0, %s120
    $region4: #{tpu_custom_call.1} parent=1 // loop_header_branch
      %20 = sbr.rel (%p18) target = $region8
    $region5: #{tpu_custom_call.1} parent=1 // loop_body
      %s22 = ssub.s32 %s17, 1
      %s23 = ssub.s32 %s17, 2
      %s24 = sadd.s32 %s17, 1
      %s25 = ssub.s32 %s17, %s24
      %p26 = scmp.eq.s32.totalorder %s25, 0
      %s28 = sadd.s32 %s27, 1
      %s29 = scalar_select %p26, %s27, %s28
      %p32 = pneg %p26
      %p33 = scmp.eq.s32.totalorder %s17, 1
      %p34 = por %p32, %p33
      %p35 = scmp.ne.s32.totalorder %s27, %s30
      %p36 = scmp.eq.s32.totalorder %s17, 0
      %p37 = por %p35, %p36
      %p38 = scmp.ne.s32.totalorder %s27, %s30
      %p39 = scmp.eq.s32.totalorder %s22, 1
      %p40 = por %p38, %p39
      %p41 = scmp.ne.s32.totalorder %s30, %s31
      %p42 = scmp.eq.s32.totalorder %s22, 0
      %p43 = por %p41, %p42
      %p44 = scmp.ne.s32.totalorder %s30, %s31
      %p45 = scmp.eq.s32.totalorder %s23, 1
      %p46 = por %p44, %p45
      %p48 = scmp.ne.s32.totalorder %s31, %s47
      %p49 = scmp.eq.s32.totalorder %s23, 0
      %p50 = por %p48, %p49
      %s52 = sadd.s32 %s51, 1
      %p55 = scmp.eq.s32.totalorder %s17, 1
      %p56 = scmp.ne.s32.totalorder %s51, %s53
      %p57 = scmp.eq.s32.totalorder %s17, 0
      %p58 = por %p56, %p57
      %p59 = scmp.ne.s32.totalorder %s51, %s53
      %p60 = scmp.eq.s32.totalorder %s22, 1
      %p61 = por %p59, %p60
      %p62 = scmp.ne.s32.totalorder %s53, %s54
      %p63 = scmp.eq.s32.totalorder %s22, 0
      %p64 = por %p62, %p63
      %p65 = scmp.ne.s32.totalorder %s53, %s54
      %p66 = scmp.eq.s32.totalorder %s23, 1
      %p67 = por %p65, %p66
      %p69 = scmp.ne.s32.totalorder %s54, %s68
      %p70 = scmp.eq.s32.totalorder %s23, 0
      %p71 = por %p69, %p70
      %s73 = sadd.s32 %s72, 1
      %p76 = scmp.eq.s32.totalorder %s17, 1
      %p77 = scmp.ne.s32.totalorder %s72, %s74
      %p78 = scmp.eq.s32.totalorder %s17, 0
      %p79 = por %p77, %p78
      %p80 = scmp.ne.s32.totalorder %s72, %s74
      %p81 = scmp.eq.s32.totalorder %s22, 1
      %p82 = por %p80, %p81
      %p83 = scmp.ne.s32.totalorder %s74, %s75
      %p84 = scmp.eq.s32.totalorder %s22, 0
      %p85 = por %p83, %p84
      %p86 = scmp.ne.s32.totalorder %s74, %s75
      %p87 = scmp.eq.s32.totalorder %s23, 1
      %p88 = por %p86, %p87
      %p90 = scmp.ne.s32.totalorder %s75, %s89
      %p91 = scmp.eq.s32.totalorder %s23, 0
      %p92 = por %p90, %p91
      %s94 = sadd.s32 %s93, 1
      %p97 = scmp.eq.s32.totalorder %s17, 1
      %p98 = scmp.ne.s32.totalorder %s93, %s95
      %p99 = scmp.eq.s32.totalorder %s17, 0
      %p100 = por %p98, %p99
      %p101 = scmp.ne.s32.totalorder %s93, %s95
      %p102 = scmp.eq.s32.totalorder %s22, 1
      %p103 = por %p101, %p102
      %p104 = scmp.ne.s32.totalorder %s95, %s96
      %p105 = scmp.eq.s32.totalorder %s22, 0
      %p106 = por %p104, %p105
      %p107 = scmp.ne.s32.totalorder %s95, %s96
      %p108 = scmp.eq.s32.totalorder %s23, 1
      %p109 = por %p107, %p108
      %p111 = scmp.ne.s32.totalorder %s96, %s110
      %p112 = scmp.eq.s32.totalorder %s23, 0
      %p113 = por %p111, %p112
      %s114 = ssub.s32 %s17, %s24
      %p115 = scmp.eq.s32.totalorder %s114, 0
      %s117 = sadd.s32 %s116, 1
      %s118 = scalar_select %p115, %s116, %s117
      %p121 = pneg %p115
      %p122 = scmp.eq.s32.totalorder %s17, 1
      %p123 = por %p121, %p122
      %p124 = scmp.ne.s32.totalorder %s116, %s119
      %p125 = scmp.eq.s32.totalorder %s17, 0
      %p126 = por %p124, %p125
      %p127 = scmp.ne.s32.totalorder %s116, %s119
      %p128 = scmp.eq.s32.totalorder %s22, 1
      %p129 = por %p127, %p128
      %p130 = scmp.ne.s32.totalorder %s119, %s120
      %p131 = scmp.eq.s32.totalorder %s22, 0
      %p132 = por %p130, %p131
      %p133 = scmp.ne.s32.totalorder %s119, %s120
      %p134 = scmp.eq.s32.totalorder %s23, 1
      %p135 = por %p133, %p134
      %p137 = scmp.ne.s32.totalorder %s120, %s136
      %p138 = scmp.eq.s32.totalorder %s23, 0
      %p139 = por %p137, %p138
      %p140 = scmp.le.s32.totalorder 1, %s17
      %p141 = scmp.lt.s32.totalorder %s17, 3
      %p142 = pnand %p140, %p141
      %p143 = pneg %p142
      // Predicated region
      $region9: #{tpu_custom_call.1} parent=5 // pred_check
        _
      $region10: #{tpu_custom_call.1} parent=5 // pred_check_branch
        %145 = sbr.rel (%p142) target = $region12
      $region11: #{tpu_custom_call.1} parent=5 // pred_region
        %s146 = ssub.s32 %s17, 1
        // Predicated region
        $region13: #{tpu_custom_call.1} parent=11 // pred_check
          %p147 = pneg %p64
        $region14: #{tpu_custom_call.1} parent=11 // pred_check_branch
          %149 = sbr.rel (%p147) target = $region16
        $region15: #{tpu_custom_call.1} parent=11 // pred_region
          %151 = vsyncadd [#allocation7], 0
          %s152 = sshll.u32 %s1, 4
          %s153 = int_to_ptr.hbm [resolvable:$true] %s152
          %s154 = sshll.u32 [#allocation6], 4
          %s155 = int_to_ptr.vmem [resolvable:$true] %s154
          %160 = dma.hbm_to_vmem [thread:$0]  %s153, 256, %s155, [#allocation7], 64, 64, 4
        $region16: #{tpu_custom_call.1} parent=11 // pred_fallthru
          _
        // Predicated region
        $region17: #{tpu_custom_call.1} parent=11 // pred_check
          %p161 = pneg %p85
        $region18: #{tpu_custom_call.1} parent=11 // pred_check_branch
          %163 = sbr.rel (%p161) target = $region20
        $region19: #{tpu_custom_call.1} parent=11 // pred_region
          %165 = vsyncadd [#allocation7], 0
          %s166 = sshll.u32 %s2, 4
          %s167 = int_to_ptr.hbm [resolvable:$true] %s166
          %s168 = sshll.u32 [#allocation8], 4
          %s169 = int_to_ptr.vmem [resolvable:$true] %s168
          %174 = dma.hbm_to_vmem [thread:$0]  %s167, 256, %s169, [#allocation7], 64, 64, 4
        $region20: #{tpu_custom_call.1} parent=11 // pred_fallthru
          _
        // Predicated region
        $region21: #{tpu_custom_call.1} parent=11 // pred_check
          %p175 = pneg %p106
        $region22: #{tpu_custom_call.1} parent=11 // pred_check_branch
          %177 = sbr.rel (%p175) target = $region24
        $region23: #{tpu_custom_call.1} parent=11 // pred_region
          _
        $region24: #{tpu_custom_call.1} parent=11 // pred_fallthru
          _
      $region12: #{tpu_custom_call.1} parent=5 // pred_fallthru
        _
      %p178 = scmp.lt.s32.totalorder %s17, 2
      // Predicated region
      $region25: #{tpu_custom_call.1} parent=5 // pred_check
        %p179 = pneg %p178
      $region26: #{tpu_custom_call.1} parent=5 // pred_check_branch
        %181 = sbr.rel (%p179) target = $region28
      $region27: #{tpu_custom_call.1} parent=5 // pred_region
        // Predicated region
        $region29: #{tpu_custom_call.1} parent=27 // pred_check
          %p182 = pneg %p37
        $region30: #{tpu_custom_call.1} parent=27 // pred_check_branch
          %184 = sbr.rel (%p182) target = $region32
        $region31: #{tpu_custom_call.1} parent=27 // pred_region
          %s185 = sand.u32 %s27, 1
          %s186 = scalar_lea.sflag [#allocation4], %s185
          %s187 = sand.u32 %s27, 1
          %s188 = smul.addr %s187, 8
          %s189 = scalar_lea.vmem [#allocation3], %s188
          %191 = vsyncadd %s186, 0
          %s192 = smul.addr %s17, 8
          %s193 = scalar_lea.hbm %s0, %s192
          %s195 = sshll.u32 %s193, 4
          %s196 = int_to_ptr.hbm [resolvable:$true] %s195
          %s197 = sshll.u32 %s189, 4
          %s198 = int_to_ptr.vmem [resolvable:$true] %s197
          %200 = dma.hbm_to_vmem [thread:$0]  %s196, 128, %s198, %s186
        $region32: #{tpu_custom_call.1} parent=27 // pred_fallthru
          _
      $region28: #{tpu_custom_call.1} parent=5 // pred_fallthru
        _
      %p201 = scmp.le.s32.totalorder 1, %s17
      %p202 = scmp.lt.s32.totalorder %s17, 3
      %p203 = pnand %p201, %p202
      %p204 = pneg %p203
      // Predicated region
      $region33: #{tpu_custom_call.1} parent=5 // pred_check
        _
      $region34: #{tpu_custom_call.1} parent=5 // pred_check_branch
        %206 = sbr.rel (%p203) target = $region36
      $region35: #{tpu_custom_call.1} parent=5 // pred_region
        %s207 = ssub.s32 %s17, 1
        %s208 = sand.u32 %s30, 1
        %s209 = scalar_lea.sflag [#allocation4], %s208
        %s210 = sand.u32 %s30, 1
        %s211 = smul.addr %s210, 8
        %s212 = scalar_lea.vmem [#allocation3], %s211
        // Predicated region
        $region37: #{tpu_custom_call.1} parent=35 // pred_check
          %p213 = pneg %p43
        $region38: #{tpu_custom_call.1} parent=35 // pred_check_branch
          %215 = sbr.rel (%p213) target = $region40
        $region39: #{tpu_custom_call.1} parent=35 // pred_region
          %217 = dma.done %s209, 128
        $region40: #{tpu_custom_call.1} parent=35 // pred_fallthru
          _
        // Predicated region
        $region41: #{tpu_custom_call.1} parent=35 // pred_check
          %p218 = pneg %p64
        $region42: #{tpu_custom_call.1} parent=35 // pred_check_branch
          %220 = sbr.rel (%p218) target = $region44
        $region43: #{tpu_custom_call.1} parent=35 // pred_region
          %222 = dma.done [#allocation7], 256
        $region44: #{tpu_custom_call.1} parent=35 // pred_fallthru
          _
        // Predicated region
        $region45: #{tpu_custom_call.1} parent=35 // pred_check
          %p223 = pneg %p85
        $region46: #{tpu_custom_call.1} parent=35 // pred_check_branch
          %225 = sbr.rel (%p223) target = $region48
        $region47: #{tpu_custom_call.1} parent=35 // pred_region
          %227 = dma.done [#allocation7], 256
        $region48: #{tpu_custom_call.1} parent=35 // pred_fallthru
          _
        %s228 = sand.u32 %s30, 1
        %s229 = scalar_lea.sflag [#allocation4], %s228
        %s230 = sand.u32 %s30, 1
        %s231 = smul.addr %s230, 8
        %s232 = scalar_lea.vmem [#allocation3], %s231
        %p233 = pneg %p43
        %p234 = pneg %p40
        %p235 = pneg %p64
        %p236 = pneg %p61
        %p237 = pneg %p85
        %p238 = pneg %p82
        %p239 = pneg %p106
        %p240 = pneg %p103
        %p241 = pneg %p132
        %p242 = pneg %p129
        %s243 = sand.u32 %s119, 1
        %s244 = scalar_lea.sflag [#allocation5], %s243
        %s245 = sand.u32 %s119, 1
        %s246 = smul.addr %s245, 8
        %s247 = scalar_lea.vmem [#allocation9], %s246
        %v249 = vld [vmem:[%s212] sm:$0xff]
        %v250 = vpack.c.bf16 %v249, %v249
        %v251 = vld [vmem:[#allocation6] sm:$0xf]
        %v252 = vld [vmem:[#allocation6 + $0x4] sm:$0xf]
        %v253 = vld [vmem:[#allocation6 + $0x8] sm:$0xf]
        %v254 = vld [vmem:[#allocation6 + $0xc] sm:$0xf]
        %v259 = vunpack.c.l.b16 %v251
        %v260 = vunpack.c.l.b16 %v252
        %v261 = vunpack.c.l.b16 %v253
        %v262 = vunpack.c.l.b16 %v254
        %v263 = vpack.c.b16 %v260, %v259
        %v264 = vpack.c.b16 %v262, %v261
        %vm267 = vcmask 261120
        %v269 = vsel %vm267, %v250, 0
        %271 = vmatpush.bf16.msra.mxu0 0
        %272 = vmatpush.bf16.msra.mxu0 0
        %273 = vmatpush.bf16.msra.mxu0 0
        %274 = vmatpush.bf16.msra.mxu0 0
        %275 = vmatpush.bf16.msra.mxu0 0
        %276 = vmatpush.bf16.msra.mxu0 0
        %277 = vmatpush.bf16.msra.mxu0 %v264
        %278 = vmatpush.bf16.msra.mxu0 %v263
        %279 = vmatmul.bf16.gmra.mxu0 %v269
        %v280 = vpop.f32.mrf.mxu0
        %v281 = vadd.f32 0.0, %v280
        %v282 = vpop.f32.mrf.mxu0
        %283 = vdwg.mxu0
        %v284 = vpack.c.bf16 %v281, %v281
        %286 = vrot.lane.b32.xlu0 %v284, 96
        %v287 = vpop.permute.xlu0 %286
        %vm288 = vcmask 64512
        %v290 = vsel %vm288, %v284, 0
        %v293 = vsel %vm288, %v287, 0
        %295 = vmatpush.bf16.xpose.msra.mxu0 0
        %296 = vmatpush.bf16.xpose.msra.mxu0 0
        %297 = vmatpush.bf16.xpose.msra.mxu0 0
        %298 = vmatpush.bf16.xpose.msra.mxu0 0
        %299 = vmatpush.bf16.xpose.msra.mxu0 0
        %300 = vmatpush.bf16.xpose.msra.mxu0 0
        %301 = vmatpush.bf16.xpose.msra.mxu0 0
        %302 = vmatpush.bf16.xpose.msra.mxu0 %v293
        %303 = vmatmul.bf16.gmra.mxu0 %v290
        %v304 = vpop.f32.mrf.mxu0
        %v305 = vadd.f32 0.0, %v304
        %v306 = vpop.f32.mrf.mxu0
        %307 = vdwg.mxu0
        %v308 = vsel %vm288, %v305, -inf
        %309 = vmax.xlane.f32.xlu0 %v308
        %v310 = vpop.xlane.xlu0 %309
        %v311 = vsub.f32 %v305, %v310
        %v312 = vmul.f32 %v311, 1.442695
        %v313 = vpow.pop %v312
        %v314 = vsel %vm288, %v313, 0.0
        %315 = vadd.xlane.f32.xlu0 %v314
        %v316 = vpop.xlane.xlu0 %315
        %v317 = vrcp.pop %v316
        %v318 = vmul.f32 %v313, %v317
        %v319 = vpack.c.bf16 %v318, %v318
        %320 = vrot.lane.b32.xlu0 %v284, 64
        %v321 = vpop.permute.xlu0 %320
        %v323 = vsel %vm288, %v319, 0
        %vm325 = vcmask 1043456
        %v327 = vsel %vm325, %v321, 0
        %329 = vmatpush.bf16.msra.mxu0 0
        %330 = vmatpush.bf16.msra.mxu0 0
        %331 = vmatpush.bf16.msra.mxu0 0
        %332 = vmatpush.bf16.msra.mxu0 0
        %333 = vmatpush.bf16.msra.mxu0 0
        %334 = vmatpush.bf16.msra.mxu0 0
        %335 = vmatpush.bf16.msra.mxu0 0
        %336 = vmatpush.bf16.msra.mxu0 %v327
        %337 = vmatmul.bf16.gmra.mxu0 %v323
        %v338 = vpop.f32.mrf.mxu0
        %v339 = vadd.f32 0.0, %v338
        %v340 = vpop.f32.mrf.mxu0
        %341 = vdwg.mxu0
        %342 = vst.msk [vmem:[#allocation2] sm:$0xff] %vm288, %v339
        %343 = vrot.lane.b32.xlu0 %v284, 120
        %v344 = vpop.permute.xlu0 %343
        %345 = vrot.lane.b32.xlu0 %v284, 88
        %v346 = vpop.permute.xlu0 %345
        %v348 = vsel %vm288, %v344, 0
        %v351 = vsel %vm288, %v346, 0
        %353 = vmatpush.bf16.xpose.msra.mxu0 0
        %354 = vmatpush.bf16.xpose.msra.mxu0 0
        %355 = vmatpush.bf16.xpose.msra.mxu0 0
        %356 = vmatpush.bf16.xpose.msra.mxu0 0
        %357 = vmatpush.bf16.xpose.msra.mxu0 0
        %358 = vmatpush.bf16.xpose.msra.mxu0 0
        %359 = vmatpush.bf16.xpose.msra.mxu0 0
        %360 = vmatpush.bf16.xpose.msra.mxu0 %v351
        %361 = vmatmul.bf16.gmra.mxu0 %v348
        %v362 = vpop.f32.mrf.mxu0
        %v363 = vadd.f32 0.0, %v362
        %v364 = vpop.f32.mrf.mxu0
        %365 = vdwg.mxu0
        %v366 = vsel %vm288, %v363, -inf
        %367 = vmax.xlane.f32.xlu0 %v366
        %v368 = vpop.xlane.xlu0 %367
        %v369 = vsub.f32 %v363, %v368
        %v370 = vmul.f32 %v369, 1.442695
        %v371 = vpow.pop %v370
        %v372 = vsel %vm288, %v371, 0.0
        %373 = vadd.xlane.f32.xlu0 %v372
        %v374 = vpop.xlane.xlu0 %373
        %v375 = vrcp.pop %v374
        %v376 = vmul.f32 %v371, %v375
        %v377 = vpack.c.bf16 %v376, %v376
        %378 = vrot.lane.b32.xlu0 %v284, 56
        %v379 = vpop.permute.xlu0 %378
        %v381 = vsel %vm288, %v377, 0
        %v384 = vsel %vm325, %v379, 0
        %386 = vmatpush.bf16.msra.mxu0 0
        %387 = vmatpush.bf16.msra.mxu0 0
        %388 = vmatpush.bf16.msra.mxu0 0
        %389 = vmatpush.bf16.msra.mxu0 0
        %390 = vmatpush.bf16.msra.mxu0 0
        %391 = vmatpush.bf16.msra.mxu0 0
        %392 = vmatpush.bf16.msra.mxu0 0
        %393 = vmatpush.bf16.msra.mxu0 %v384
        %394 = vmatmul.bf16.gmra.mxu0 %v381
        %v395 = vpop.f32.mrf.mxu0
        %v396 = vadd.f32 0.0, %v395
        %v397 = vpop.f32.mrf.mxu0
        %398 = vdwg.mxu0
        %400 = vrot.lane.b32.xlu0 %v396, 8
        %v401 = vpop.permute.xlu0 %400
        %vm403 = vcmask 130112
        %404 = vst.msk [vmem:[#allocation2] sm:$0xff] %vm403, %v401
        %405 = vrot.lane.b32.xlu0 %v284, 112
        %v406 = vpop.permute.xlu0 %405
        %407 = vrot.lane.b32.xlu0 %v284, 80
        %v408 = vpop.permute.xlu0 %407
        %v410 = vsel %vm288, %v406, 0
        %v413 = vsel %vm288, %v408, 0
        %415 = vmatpush.bf16.xpose.msra.mxu0 0
        %416 = vmatpush.bf16.xpose.msra.mxu0 0
        %417 = vmatpush.bf16.xpose.msra.mxu0 0
        %418 = vmatpush.bf16.xpose.msra.mxu0 0
        %419 = vmatpush.bf16.xpose.msra.mxu0 0
        %420 = vmatpush.bf16.xpose.msra.mxu0 0
        %421 = vmatpush.bf16.xpose.msra.mxu0 0
        %422 = vmatpush.bf16.xpose.msra.mxu0 %v413
        %423 = vmatmul.bf16.gmra.mxu0 %v410
        %v424 = vpop.f32.mrf.mxu0
        %v425 = vadd.f32 0.0, %v424
        %v426 = vpop.f32.mrf.mxu0
        %427 = vdwg.mxu0
        %v428 = vsel %vm288, %v425, -inf
        %429 = vmax.xlane.f32.xlu0 %v428
        %v430 = vpop.xlane.xlu0 %429
        %v431 = vsub.f32 %v425, %v430
        %v432 = vmul.f32 %v431, 1.442695
        %v433 = vpow.pop %v432
        %v434 = vsel %vm288, %v433, 0.0
        %435 = vadd.xlane.f32.xlu0 %v434
        %v436 = vpop.xlane.xlu0 %435
        %v437 = vrcp.pop %v436
        %v438 = vmul.f32 %v433, %v437
        %v439 = vpack.c.bf16 %v438, %v438
        %440 = vrot.lane.b32.xlu0 %v284, 48
        %v441 = vpop.permute.xlu0 %440
        %v443 = vsel %vm288, %v439, 0
        %v446 = vsel %vm325, %v441, 0
        %448 = vmatpush.bf16.msra.mxu0 0
        %449 = vmatpush.bf16.msra.mxu0 0
        %450 = vmatpush.bf16.msra.mxu0 0
        %451 = vmatpush.bf16.msra.mxu0 0
        %452 = vmatpush.bf16.msra.mxu0 0
        %453 = vmatpush.bf16.msra.mxu0 0
        %454 = vmatpush.bf16.msra.mxu0 0
        %455 = vmatpush.bf16.msra.mxu0 %v446
        %456 = vmatmul.bf16.gmra.mxu0 %v443
        %v457 = vpop.f32.mrf.mxu0
        %v458 = vadd.f32 0.0, %v457
        %v459 = vpop.f32.mrf.mxu0
        %460 = vdwg.mxu0
        %462 = vrot.lane.b32.xlu0 %v458, 16
        %v463 = vpop.permute.xlu0 %462
        %vm465 = vcmask 195712
        %466 = vst.msk [vmem:[#allocation2] sm:$0xff] %vm465, %v463
        %467 = vrot.lane.b32.xlu0 %v284, 104
        %v468 = vpop.permute.xlu0 %467
        %469 = vrot.lane.b32.xlu0 %v284, 72
        %v470 = vpop.permute.xlu0 %469
        %v472 = vsel %vm288, %v468, 0
        %v475 = vsel %vm288, %v470, 0
        %477 = vmatpush.bf16.xpose.msra.mxu0 0
        %478 = vmatpush.bf16.xpose.msra.mxu0 0
        %479 = vmatpush.bf16.xpose.msra.mxu0 0
        %480 = vmatpush.bf16.xpose.msra.mxu0 0
        %481 = vmatpush.bf16.xpose.msra.mxu0 0
        %482 = vmatpush.bf16.xpose.msra.mxu0 0
        %483 = vmatpush.bf16.xpose.msra.mxu0 0
        %484 = vmatpush.bf16.xpose.msra.mxu0 %v475
        %485 = vmatmul.bf16.gmra.mxu0 %v472
        %v486 = vpop.f32.mrf.mxu0
        %v487 = vadd.f32 0.0, %v486
        %v488 = vpop.f32.mrf.mxu0
        %489 = vdwg.mxu0
        %v490 = vsel %vm288, %v487, -inf
        %491 = vmax.xlane.f32.xlu0 %v490
        %v492 = vpop.xlane.xlu0 %491
        %v493 = vsub.f32 %v487, %v492
        %v494 = vmul.f32 %v493, 1.442695
        %v495 = vpow.pop %v494
        %v496 = vsel %vm288, %v495, 0.0
        %497 = vadd.xlane.f32.xlu0 %v496
        %v498 = vpop.xlane.xlu0 %497
        %v499 = vrcp.pop %v498
        %v500 = vmul.f32 %v495, %v499
        %v501 = vpack.c.bf16 %v500, %v500
        %502 = vrot.lane.b32.xlu0 %v284, 40
        %v503 = vpop.permute.xlu0 %502
        %v505 = vsel %vm288, %v501, 0
        %v508 = vsel %vm325, %v503, 0
        %510 = vmatpush.bf16.msra.mxu0 0
        %511 = vmatpush.bf16.msra.mxu0 0
        %512 = vmatpush.bf16.msra.mxu0 0
        %513 = vmatpush.bf16.msra.mxu0 0
        %514 = vmatpush.bf16.msra.mxu0 0
        %515 = vmatpush.bf16.msra.mxu0 0
        %516 = vmatpush.bf16.msra.mxu0 0
        %517 = vmatpush.bf16.msra.mxu0 %v508
        %518 = vmatmul.bf16.gmra.mxu0 %v505
        %v519 = vpop.f32.mrf.mxu0
        %v520 = vadd.f32 0.0, %v519
        %v521 = vpop.f32.mrf.mxu0
        %522 = vdwg.mxu0
        %524 = vrot.lane.b32.xlu0 %v520, 24
        %v525 = vpop.permute.xlu0 %524
        %vm527 = vcmask 261312
        %528 = vst.msk [vmem:[#allocation2] sm:$0xff] %vm527, %v525
        %v529 = vld [vmem:[#allocation2] sm:$0xff]
        %v530 = vpack.c.bf16 %v529, %v529
        %v531 = vld [vmem:[#allocation8] sm:$0xf]
        %v532 = vld [vmem:[#allocation8 + $0x4] sm:$0xf]
        %v533 = vld [vmem:[#allocation8 + $0x8] sm:$0xf]
        %v534 = vld [vmem:[#allocation8 + $0xc] sm:$0xf]
        %v535 = vld [vmem:[%s3] sm:$0x1]
        %v537 = vperm.slane %v535, 0
        %v543 = vunpack.c.l.b16 %v531
        %v544 = vunpack.c.l.b16 %v532
        %v545 = vunpack.c.l.b16 %v533
        %v546 = vunpack.c.l.b16 %v534
        %v547 = vpack.c.b16 %v544, %v543
        %v548 = vpack.c.b16 %v546, %v545
        %v552 = vsel %vm267, %v530, 0
        %554 = vmatpush.bf16.msra.mxu0 0
        %555 = vmatpush.bf16.msra.mxu0 0
        %556 = vmatpush.bf16.msra.mxu0 0
        %557 = vmatpush.bf16.msra.mxu0 0
        %558 = vmatpush.bf16.msra.mxu0 0
        %559 = vmatpush.bf16.msra.mxu0 0
        %560 = vmatpush.bf16.msra.mxu0 %v548
        %561 = vmatpush.bf16.msra.mxu0 %v547
        %562 = vmatmul.bf16.gmra.mxu0 %v552
        %v563 = vpop.f32.mrf.mxu0
        %v564 = vadd.f32 %v537, %v563
        %v565 = vpop.f32.mrf.mxu0
        %566 = vdwg.mxu0
        %567 = vst.msk [vmem:[%s247] sm:$0xff] %vm267, %v564
        %s568 = sand.u32 %s119, 1
        %s569 = scalar_lea.sflag [#allocation5], %s568
        %s570 = sand.u32 %s119, 1
        %s571 = smul.addr %s570, 8
        %s572 = scalar_lea.vmem [#allocation9], %s571
        // Predicated region
        $region49: #{tpu_custom_call.1} parent=35 // pred_check
          %p573 = pneg %p129
        $region50: #{tpu_custom_call.1} parent=35 // pred_check_branch
          %575 = sbr.rel (%p573) target = $region52
        $region51: #{tpu_custom_call.1} parent=35 // pred_region
          %577 = vsyncadd %s569, 0
          %s578 = smul.addr %s22, 8
          %s579 = scalar_lea.hbm %s4, %s578
          %s581 = sshll.u32 %s572, 4
          %s582 = int_to_ptr.vmem [resolvable:$true] %s581
          %s583 = sshll.u32 %s579, 4
          %s584 = int_to_ptr.hbm [resolvable:$true] %s583
          %586 = dma.vmem_to_hbm [thread:$0]  %s582, 128, %s584, %s569
        $region52: #{tpu_custom_call.1} parent=35 // pred_fallthru
          _
      $region36: #{tpu_custom_call.1} parent=5 // pred_fallthru
        _
      %p587 = scmp.le.s32.totalorder 2, %s17
      // Predicated region
      $region53: #{tpu_custom_call.1} parent=5 // pred_check
        %p588 = pneg %p587
      $region54: #{tpu_custom_call.1} parent=5 // pred_check_branch
        %590 = sbr.rel (%p588) target = $region56
      $region55: #{tpu_custom_call.1} parent=5 // pred_region
        %s591 = ssub.s32 %s17, 2
        // Predicated region
        $region57: #{tpu_custom_call.1} parent=55 // pred_check
          %p592 = pneg %p135
        $region58: #{tpu_custom_call.1} parent=55 // pred_check_branch
          %594 = sbr.rel (%p592) target = $region60
        $region59: #{tpu_custom_call.1} parent=55 // pred_region
          %s595 = sand.u32 %s120, 1
          %s596 = scalar_lea.sflag [#allocation5], %s595
          %s597 = sand.u32 %s120, 1
          %s598 = smul.addr %s597, 8
          %s599 = scalar_lea.vmem [#allocation9], %s598
          %601 = dma.done %s596, 128
        $region60: #{tpu_custom_call.1} parent=55 // pred_fallthru
          _
      $region56: #{tpu_custom_call.1} parent=5 // pred_fallthru
        _
    $region6: #{tpu_custom_call.1} parent=1 // loop_footer
      %s21 = sadd.s32 1, %s17
    $region7: #{tpu_custom_call.1} parent=1 // loop_footer_branch
      %16 = sbr.rel target = $region3
    $region8: #{tpu_custom_call.1} parent=1 // loop_exit
      _
    %602 = vsyncpa [#allocation4], 1
    %s603 = scalar_lea.sflag [#allocation4], 1
    %604 = vsyncpa %s603, 1
    %605 = vsyncpa [#allocation7], 1
    %606 = vsyncpa [#allocation5], 1
    %s607 = scalar_lea.sflag [#allocation5], 1
    %608 = vsyncpa %s607, 1

</llo_original>
